<compile_context>
chip_gen: v7x
topology: tpu7x:2x2x1
jax: 0.10.0
libtpu: 0.0.40
codegen_flags: <defaults>
</compile_context>

<pallas_src>
import functools

import jax
import jax.numpy as jnp
from jax.experimental import pallas as pl
from jax.experimental.pallas import tpu as pltpu


def make_grid(resolution, extents):
    """JAX equivalent of _make_grid: returns (Nz, Nx, 2) with [x, z]."""
    x1, z1, x2, z2 = extents
    zz, xx = jnp.meshgrid(
        jnp.arange(z1, z2, resolution, dtype=jnp.float32),
        jnp.arange(x1, x2, resolution, dtype=jnp.float32),
        indexing="ij",
    )
    return jnp.stack([xx, zz], axis=-1)


def _round_up(x, m):
    return ((x + m - 1) // m) * m


def _resampler_kernel(calib_ref, grid_ref, feat_ref, out_ref, *, H, W, Wp, near, far):
    b = pl.program_id(0)
    c00 = calib_ref[4 * b + 0]
    c01 = calib_ref[4 * b + 1]
    c10 = calib_ref[4 * b + 2]
    c11 = calib_ref[4 * b + 3]

    g = grid_ref[...]                      # (2, Pt) f32, lane-dense in P
    Pt = g.shape[1]
    gx = g[0:1, :]                         # (1, Pt)
    gz = g[1:2, :]                         # (1, Pt)

    # cam_coords = calib_2x2 @ [x, z]^T ; perspective divide with one reciprocal
    u = c00 * gx + c01 * gz
    zc = c10 * gx + c11 * gz
    # TODO(synk): zc <= 0 (point behind camera) yields inf/NaN exactly like the
    # PyTorch reference; not masked here to preserve forward semantics.
    inv_zc = 1.0 / zc  # exact: approx reciprocal can flip floor() at cell edges
    ucoords = jnp.clip(u * inv_zc * (2.0 / W) - 1.0, -1.1, 1.1)
    zcoords = jnp.clip((zc - near) * (2.0 / (far - near)) - 1.0, -1.1, 1.1)

    # F.grid_sample: bilinear, zeros padding, align_corners=False
    ix = ((ucoords + 1.0) * W - 1.0) * 0.5
    iy = ((zcoords + 1.0) * H - 1.0) * 0.5
    x0f = jnp.floor(ix)
    y0f = jnp.floor(iy)
    wx1 = ix - x0f
    wy1 = iy - y0f
    x0 = x0f.astype(jnp.int32)
    y0 = y0f.astype(jnp.int32)
    x1 = x0 + 1
    y1 = y0 + 1

    fdt = feat_ref.dtype

    def onehot_t(nrows, nvalid, i0, i1, w1):
        # Transposed interpolation one-hot, shape (nrows, Pt): at most two
        # non-zeros per column.  Built with nested where-selects directly in the
        # feature dtype; out-of-range corners are weight-masked (zeros padding)
        # and never match the iota.
        w0 = 1.0 - w1
        w0m = jnp.where((i0 >= 0) & (i0 < nvalid), w0, 0.0).astype(fdt)
        w1m = jnp.where((i1 >= 0) & (i1 < nvalid), w1, 0.0).astype(fdt)
        iota = jax.lax.broadcasted_iota(jnp.int32, (nrows, Pt), 0)
        zero = jnp.zeros((), fdt)
        return jnp.where(iota == i0, w0m, jnp.where(iota == i1, w1m, zero))

    sxT = onehot_t(Wp, W, x0, x1, wx1)     # (Wp, Pt), rows >= W are all zero
    syT = onehot_t(H, H, y0, y1, wy1)      # (H,  Pt)

    # Combined bilinear operator on the MXU: K = H*Wp.  The reshape is
    # layout-preserving (Wp % 8 == 0, Pt % 128 == 0).
    s_op = (syT[:, None, :] * sxT[None, :, :]).reshape(H * Wp, Pt)

    out = jnp.dot(feat_ref[...], s_op, preferred_element_type=jnp.float32)  # (C, Pt)
    out_ref[...] = out.astype(out_ref.dtype)


def resampler_forward(features, calib, grid_xy, near, far, *, p_block=512):
    """Pallas implementation of Resampler.forward(features, calib)."""
    B, C, H, W = features.shape
    Nz, Nx, _ = grid_xy.shape
    P = Nz * Nx

    # P tile (multiple of 128) and padded P.  Default 512 is v7x-safe (64 MiB
    # VMEM); on v5e/v6e (128 MiB) p_block can be swept up to 1024-2048.
    Pt = min(p_block, _round_up(P, 128))
    P_pad = _round_up(P, Pt)

    # Lane-dense BEV coordinates (2, P_pad): row 0 = x, row 1 = z. Edge-pad so
    # the padded lanes compute the same (finite) values as a valid lane.
    g = grid_xy.reshape(P, 2).astype(jnp.float32)
    gx, gz = g[:, 0], g[:, 1]
    pad = P_pad - P
    if pad:
        gx = jnp.concatenate([gx, jnp.broadcast_to(gx[-1:], (pad,))])
        gz = jnp.concatenate([gz, jnp.broadcast_to(gz[-1:], (pad,))])
    g2 = jnp.stack([gx, gz], axis=0)                      # (2, P_pad)

    # calib[:, [0, 2]][..., [0, 2]] flattened to a 1D (B*4,) SMEM array.
    calib_flat = jnp.stack(
        [calib[:, 0, 0], calib[:, 0, 2], calib[:, 2, 0], calib[:, 2, 2]], axis=-1
    ).astype(jnp.float32).reshape(B * 4)

    # Layout plumbing in the wrapper: zero-pad W to a multiple of 8 (so the
    # in-kernel operator reshape is layout-preserving) and fold H*Wp into the
    # lane / MXU-K dim.
    Wp = _round_up(W, 8)
    feats = features if Wp == W else jnp.pad(
        features, ((0, 0), (0, 0), (0, 0), (0, Wp - W)))
    feat2 = feats.reshape(B, C, H * Wp)

    # VMEM limit from the real per-tile footprint, with headroom.
    itemsize = jnp.dtype(features.dtype).itemsize
    cp = _round_up(C, 8)
    kp = _round_up(H * Wp, 128)
    hp = _round_up(H, 8)
    feat_block = cp * kp * itemsize                 # per feature buffer
    out_block = cp * Pt * itemsize                  # per output buffer
    s_op_bytes = H * Wp * Pt * itemsize             # combined operator
    onehot_bytes = (hp + Wp) * Pt * itemsize        # sxT + syT
    acc_f32 = cp * Pt * 4                           # f32 matmul accumulator
    misc_f32 = 48 * Pt * 4                          # (1, Pt) coordinate temps
    vmem_est = (2 * feat_block + 2 * out_block + 2 * (8 * Pt * 4)
                + s_op_bytes + onehot_bytes + acc_f32 + misc_f32)
    vmem_limit = int(min(64 << 20, max(2 * vmem_est, 16 << 20)))

    kernel = functools.partial(
        _resampler_kernel, H=H, W=W, Wp=Wp, near=float(near), far=float(far)
    )

    out = pl.pallas_call(
        kernel,
        out_shape=jax.ShapeDtypeStruct((B, C, P_pad), features.dtype),
        grid=(B, P_pad // Pt),
        in_specs=[
            pl.BlockSpec(memory_space=pltpu.MemorySpace.SMEM),         # calib (1D)
            pl.BlockSpec((2, Pt), lambda b, p: (0, p)),                # BEV grid slab
            pl.BlockSpec((None, C, H * Wp), lambda b, p: (b, 0, 0)),   # feat / batch
        ],
        out_specs=pl.BlockSpec((None, C, Pt), lambda b, p: (b, 0, p)),
        compiler_params=pltpu.CompilerParams(
            # B is the leading parallel axis so megacore (v7x) splits batches
            # and the per-batch feature block is not DMA'd twice.
            dimension_semantics=("parallel", "parallel"),
            vmem_limit_bytes=vmem_limit,
        ),
    )(calib_flat, g2, feat2)

    return out[:, :, :P].reshape(B, C, Nz, Nx)


# ---------------- pure-JAX reference (for correctness check) ----------------
def _grid_sample_ref_single(feat, coords):
    C, H, W = feat.shape
    ix = ((coords[..., 0] + 1.0) * W - 1.0) / 2.0
    iy = ((coords[..., 1] + 1.0) * H - 1.0) / 2.0
    x0 = jnp.floor(ix).astype(jnp.int32)
    y0 = jnp.floor(iy).astype(jnp.int32)
    wx1 = ix - x0
    wx0 = 1.0 - wx1
    wy1 = iy - y0
    wy0 = 1.0 - wy1

    def samp(xi, yi, w):
        valid = (xi >= 0) & (xi < W) & (yi >= 0) & (yi < H)
        xc = jnp.clip(xi, 0, W - 1)
        yc = jnp.clip(yi, 0, H - 1)
        v = feat[:, yc, xc]                       # (C, Nz, Nx)
        return v * (w * valid)[None]

    return (samp(x0, y0, wx0 * wy0) + samp(x0 + 1, y0, wx1 * wy0)
            + samp(x0, y0 + 1, wx0 * wy1) + samp(x0 + 1, y0 + 1, wx1 * wy1))


def resampler_ref(features, calib, grid_xy, near, far):
    W = features.shape[-1]
    calib2 = jnp.stack(
        [jnp.stack([calib[:, 0, 0], calib[:, 0, 2]], -1),
         jnp.stack([calib[:, 2, 0], calib[:, 2, 2]], -1)], axis=-2)       # (B, 2, 2)
    cam = jnp.einsum("bij,yxj->byxi", calib2, grid_xy)
    ucoords = cam[..., 0] / cam[..., 1]
    ucoords = ucoords / W * 2.0 - 1.0
    zcoords = (cam[..., 1] - near) / (far - near) * 2.0 - 1.0
    coords = jnp.clip(jnp.stack([ucoords, zcoords], -1), -1.1, 1.1)
    return jax.vmap(_grid_sample_ref_single)(features, coords)


if __name__ == "__main__":
    key = jax.random.PRNGKey(0)
    k1, k2 = jax.random.split(key)

    B, C, H, W = 2, 4, 16, 16
    resolution = 1.0
    extents = (-4.0, 1.0, 4.0, 9.0)          # x1, z1, x2, z2
    near, far = extents[1], extents[3]
    grid_xy = make_grid(resolution, extents)  # (8, 8, 2)

    features = jax.random.normal(k1, (B, C, H, W), dtype=jnp.float32)

    # Deterministic synthetic pinhole intrinsics (focal ~2, principal pt ~W/2).
    eps = 0.1 * jax.random.normal(k2, (B, 2), dtype=jnp.float32)
    calib = jnp.zeros((B, 3, 3), jnp.float32)
    calib = calib.at[:, 0, 0].set(2.0 + eps[:, 0])
    calib = calib.at[:, 0, 2].set(8.0 + eps[:, 1])
    calib = calib.at[:, 1, 1].set(2.0)
    calib = calib.at[:, 1, 2].set(8.0)
    calib = calib.at[:, 2, 2].set(1.0)

    out = resampler_forward(features, calib, grid_xy, near, far)
    out = jax.block_until_ready(out)

    ref = resampler_ref(features, calib, grid_xy, near, far)
    assert out.shape == (B, C, grid_xy.shape[0], grid_xy.shape[1])
    assert bool(jnp.allclose(out, ref, atol=1e-4, rtol=1e-4)), "mismatch vs reference"
    print("KERNEL_OK")
</pallas_src>

<mosaic_0001>
module attributes {stable_mosaic.version = 11 : i64} {
  func.func @_resampler_kernel(%arg0: i32, %arg1: i32, %arg2: memref<8xf32, #tpu.memory_space<smem>>, %arg3: memref<2x128xf32, #tpu.memory_space<vmem>>, %arg4: memref<1x4x256xf32, #tpu.memory_space<vmem>>, %arg5: memref<1x4x128xf32, #tpu.memory_space<vmem>>) attributes {dimension_semantics = [#tpu.dimension_semantics<parallel>, #tpu.dimension_semantics<parallel>], iteration_bounds = array<i64: 2, 1>, scalar_prefetch = 0 : i64, scratch_operands = 0 : i64, tpu.core_type = #tpu.core_type<tc>, window_params = [{transform_indices = @transform_0, window_bounds = array<i64: 8>}, {transform_indices = @transform_1, window_bounds = array<i64: 2, 128>}, {transform_indices = @transform_2, window_bounds = array<i64: 1, 4, 256>}, {transform_indices = @transform_3, window_bounds = array<i64: 1, 4, 128>}]} {
    %c4_i32 = arith.constant 4 : i32
    %0 = arith.muli %c4_i32, %arg0 : i32
    %c0_i32 = arith.constant 0 : i32
    %1 = arith.addi %0, %c0_i32 : i32
    %2 = arith.index_cast %1 : i32 to index
    %3 = memref.load %arg2[%2] : memref<8xf32, #tpu.memory_space<smem>>
    %c4_i32_0 = arith.constant 4 : i32
    %4 = arith.muli %c4_i32_0, %arg0 : i32
    %c1_i32 = arith.constant 1 : i32
    %5 = arith.addi %4, %c1_i32 : i32
    %6 = arith.index_cast %5 : i32 to index
    %7 = memref.load %arg2[%6] : memref<8xf32, #tpu.memory_space<smem>>
    %c4_i32_1 = arith.constant 4 : i32
    %8 = arith.muli %c4_i32_1, %arg0 : i32
    %c2_i32 = arith.constant 2 : i32
    %9 = arith.addi %8, %c2_i32 : i32
    %10 = arith.index_cast %9 : i32 to index
    %11 = memref.load %arg2[%10] : memref<8xf32, #tpu.memory_space<smem>>
    %c4_i32_2 = arith.constant 4 : i32
    %12 = arith.muli %c4_i32_2, %arg0 : i32
    %c3_i32 = arith.constant 3 : i32
    %13 = arith.addi %12, %c3_i32 : i32
    %14 = arith.index_cast %13 : i32 to index
    %15 = memref.load %arg2[%14] : memref<8xf32, #tpu.memory_space<smem>>
    %c0 = arith.constant 0 : index
    %c0_3 = arith.constant 0 : index
    %16 = vector.load %arg3[%c0, %c0_3] : memref<2x128xf32, #tpu.memory_space<vmem>>, vector<2x128xf32>
    %17 = vector.extract_strided_slice %16 {offsets = [0, 0], sizes = [1, 128], strides = [1, 1]} : vector<2x128xf32> to vector<1x128xf32>
    %18 = vector.extract_strided_slice %16 {offsets = [1, 0], sizes = [1, 128], strides = [1, 1]} : vector<2x128xf32> to vector<1x128xf32>
    %19 = vector.broadcast %3 : f32 to vector<1x128xf32>
    %20 = arith.mulf %19, %17 : vector<1x128xf32>
    %21 = vector.broadcast %7 : f32 to vector<1x128xf32>
    %22 = arith.mulf %21, %18 : vector<1x128xf32>
    %23 = arith.addf %20, %22 : vector<1x128xf32>
    %24 = vector.broadcast %11 : f32 to vector<1x128xf32>
    %25 = arith.mulf %24, %17 : vector<1x128xf32>
    %26 = vector.broadcast %15 : f32 to vector<1x128xf32>
    %27 = arith.mulf %26, %18 : vector<1x128xf32>
    %28 = arith.addf %25, %27 : vector<1x128xf32>
    %cst = arith.constant 1.000000e+00 : f32
    %29 = vector.broadcast %cst : f32 to vector<1x128xf32>
    %30 = arith.divf %29, %28 : vector<1x128xf32>
    %31 = arith.mulf %23, %30 : vector<1x128xf32>
    %cst_4 = arith.constant 1.250000e-01 : f32
    %32 = vector.broadcast %cst_4 : f32 to vector<1x128xf32>
    %33 = arith.mulf %31, %32 : vector<1x128xf32>
    %cst_5 = arith.constant 1.000000e+00 : f32
    %34 = vector.broadcast %cst_5 : f32 to vector<1x128xf32>
    %35 = arith.subf %33, %34 : vector<1x128xf32>
    %cst_6 = arith.constant -1.100000e+00 : f32
    %cst_7 = arith.constant 1.100000e+00 : f32
    %36 = vector.broadcast %cst_6 : f32 to vector<1x128xf32>
    %37 = arith.maximumf %36, %35 : vector<1x128xf32>
    %38 = vector.broadcast %cst_7 : f32 to vector<1x128xf32>
    %39 = arith.minimumf %38, %37 : vector<1x128xf32>
    %cst_8 = arith.constant 1.000000e+00 : f32
    %40 = vector.broadcast %cst_8 : f32 to vector<1x128xf32>
    %41 = arith.subf %28, %40 : vector<1x128xf32>
    %cst_9 = arith.constant 2.500000e-01 : f32
    %42 = vector.broadcast %cst_9 : f32 to vector<1x128xf32>
    %43 = arith.mulf %41, %42 : vector<1x128xf32>
    %cst_10 = arith.constant 1.000000e+00 : f32
    %44 = vector.broadcast %cst_10 : f32 to vector<1x128xf32>
    %45 = arith.subf %43, %44 : vector<1x128xf32>
    %cst_11 = arith.constant -1.100000e+00 : f32
    %cst_12 = arith.constant 1.100000e+00 : f32
    %46 = vector.broadcast %cst_11 : f32 to vector<1x128xf32>
    %47 = arith.maximumf %46, %45 : vector<1x128xf32>
    %48 = vector.broadcast %cst_12 : f32 to vector<1x128xf32>
    %49 = arith.minimumf %48, %47 : vector<1x128xf32>
    %cst_13 = arith.constant 1.000000e+00 : f32
    %50 = vector.broadcast %cst_13 : f32 to vector<1x128xf32>
    %51 = arith.addf %39, %50 : vector<1x128xf32>
    %cst_14 = arith.constant 1.600000e+01 : f32
    %52 = vector.broadcast %cst_14 : f32 to vector<1x128xf32>
    %53 = arith.mulf %51, %52 : vector<1x128xf32>
    %cst_15 = arith.constant 1.000000e+00 : f32
    %54 = vector.broadcast %cst_15 : f32 to vector<1x128xf32>
    %55 = arith.subf %53, %54 : vector<1x128xf32>
    %cst_16 = arith.constant 5.000000e-01 : f32
    %56 = vector.broadcast %cst_16 : f32 to vector<1x128xf32>
    %57 = arith.mulf %55, %56 : vector<1x128xf32>
    %cst_17 = arith.constant 1.000000e+00 : f32
    %58 = vector.broadcast %cst_17 : f32 to vector<1x128xf32>
    %59 = arith.addf %49, %58 : vector<1x128xf32>
    %cst_18 = arith.constant 1.600000e+01 : f32
    %60 = vector.broadcast %cst_18 : f32 to vector<1x128xf32>
    %61 = arith.mulf %59, %60 : vector<1x128xf32>
    %cst_19 = arith.constant 1.000000e+00 : f32
    %62 = vector.broadcast %cst_19 : f32 to vector<1x128xf32>
    %63 = arith.subf %61, %62 : vector<1x128xf32>
    %cst_20 = arith.constant 5.000000e-01 : f32
    %64 = vector.broadcast %cst_20 : f32 to vector<1x128xf32>
    %65 = arith.mulf %63, %64 : vector<1x128xf32>
    %66 = math.floor %57 : vector<1x128xf32>
    %67 = math.floor %65 : vector<1x128xf32>
    %68 = arith.subf %57, %66 : vector<1x128xf32>
    %69 = arith.subf %65, %67 : vector<1x128xf32>
    %70 = arith.fptosi %66 : vector<1x128xf32> to vector<1x128xi32>
    %71 = arith.fptosi %67 : vector<1x128xf32> to vector<1x128xi32>
    %c1_i32_21 = arith.constant 1 : i32
    %72 = vector.broadcast %c1_i32_21 : i32 to vector<1x128xi32>
    %73 = arith.addi %70, %72 : vector<1x128xi32>
    %c1_i32_22 = arith.constant 1 : i32
    %74 = vector.broadcast %c1_i32_22 : i32 to vector<1x128xi32>
    %75 = arith.addi %71, %74 : vector<1x128xi32>
    %cst_23 = arith.constant 1.000000e+00 : f32
    %76 = vector.broadcast %cst_23 : f32 to vector<1x128xf32>
    %77 = arith.subf %76, %68 : vector<1x128xf32>
    %c0_i32_24 = arith.constant 0 : i32
    %78 = vector.broadcast %c0_i32_24 : i32 to vector<1x128xi32>
    %79 = arith.cmpi sge, %70, %78 : vector<1x128xi32>
    %c16_i32 = arith.constant 16 : i32
    %80 = vector.broadcast %c16_i32 : i32 to vector<1x128xi32>
    %81 = arith.cmpi slt, %70, %80 : vector<1x128xi32>
    %82 = arith.andi %79, %81 : vector<1x128xi1>
    %cst_25 = arith.constant 0.000000e+00 : f32
    %83 = vector.broadcast %cst_25 : f32 to vector<1x128xf32>
    %84 = arith.select %82, %77, %83 : vector<1x128xi1>, vector<1x128xf32>
    %c0_i32_26 = arith.constant 0 : i32
    %85 = vector.broadcast %c0_i32_26 : i32 to vector<1x128xi32>
    %86 = arith.cmpi sge, %73, %85 : vector<1x128xi32>
    %c16_i32_27 = arith.constant 16 : i32
    %87 = vector.broadcast %c16_i32_27 : i32 to vector<1x128xi32>
    %88 = arith.cmpi slt, %73, %87 : vector<1x128xi32>
    %89 = arith.andi %86, %88 : vector<1x128xi1>
    %cst_28 = arith.constant 0.000000e+00 : f32
    %90 = vector.broadcast %cst_28 : f32 to vector<1x128xf32>
    %91 = arith.select %89, %68, %90 : vector<1x128xi1>, vector<1x128xf32>
    %92 = tpu.iota {dimensions = array<i32: 0>} : vector<16x128xi32>
    %93 = vector.broadcast %70 : vector<1x128xi32> to vector<16x128xi32>
    %94 = arith.cmpi eq, %92, %93 : vector<16x128xi32>
    %95 = vector.broadcast %73 : vector<1x128xi32> to vector<16x128xi32>
    %96 = arith.cmpi eq, %92, %95 : vector<16x128xi32>
    %cst_29 = arith.constant 0.000000e+00 : f32
    %97 = vector.shape_cast %91 : vector<1x128xf32> to vector<1x128xf32>
    %98 = vector.broadcast %97 : vector<1x128xf32> to vector<16x128xf32>
    %99 = vector.broadcast %cst_29 : f32 to vector<16x128xf32>
    %100 = arith.select %96, %98, %99 : vector<16x128xi1>, vector<16x128xf32>
    %101 = vector.shape_cast %84 : vector<1x128xf32> to vector<1x128xf32>
    %102 = vector.broadcast %101 : vector<1x128xf32> to vector<16x128xf32>
    %103 = arith.select %94, %102, %100 : vector<16x128xi1>, vector<16x128xf32>
    %cst_30 = arith.constant 1.000000e+00 : f32
    %104 = vector.broadcast %cst_30 : f32 to vector<1x128xf32>
    %105 = arith.subf %104, %69 : vector<1x128xf32>
    %c0_i32_31 = arith.constant 0 : i32
    %106 = vector.broadcast %c0_i32_31 : i32 to vector<1x128xi32>
    %107 = arith.cmpi sge, %71, %106 : vector<1x128xi32>
    %c16_i32_32 = arith.constant 16 : i32
    %108 = vector.broadcast %c16_i32_32 : i32 to vector<1x128xi32>
    %109 = arith.cmpi slt, %71, %108 : vector<1x128xi32>
    %110 = arith.andi %107, %109 : vector<1x128xi1>
    %cst_33 = arith.constant 0.000000e+00 : f32
    %111 = vector.broadcast %cst_33 : f32 to vector<1x128xf32>
    %112 = arith.select %110, %105, %111 : vector<1x128xi1>, vector<1x128xf32>
    %c0_i32_34 = arith.constant 0 : i32
    %113 = vector.broadcast %c0_i32_34 : i32 to vector<1x128xi32>
    %114 = arith.cmpi sge, %75, %113 : vector<1x128xi32>
    %c16_i32_35 = arith.constant 16 : i32
    %115 = vector.broadcast %c16_i32_35 : i32 to vector<1x128xi32>
    %116 = arith.cmpi slt, %75, %115 : vector<1x128xi32>
    %117 = arith.andi %114, %116 : vector<1x128xi1>
    %cst_36 = arith.constant 0.000000e+00 : f32
    %118 = vector.broadcast %cst_36 : f32 to vector<1x128xf32>
    %119 = arith.select %117, %69, %118 : vector<1x128xi1>, vector<1x128xf32>
    %120 = tpu.iota {dimensions = array<i32: 0>} : vector<16x128xi32>
    %121 = vector.broadcast %71 : vector<1x128xi32> to vector<16x128xi32>
    %122 = arith.cmpi eq, %120, %121 : vector<16x128xi32>
    %123 = vector.broadcast %75 : vector<1x128xi32> to vector<16x128xi32>
    %124 = arith.cmpi eq, %120, %123 : vector<16x128xi32>
    %cst_37 = arith.constant 0.000000e+00 : f32
    %125 = vector.shape_cast %119 : vector<1x128xf32> to vector<1x128xf32>
    %126 = vector.broadcast %125 : vector<1x128xf32> to vector<16x128xf32>
    %127 = vector.broadcast %cst_37 : f32 to vector<16x128xf32>
    %128 = arith.select %124, %126, %127 : vector<16x128xi1>, vector<16x128xf32>
    %129 = vector.shape_cast %112 : vector<1x128xf32> to vector<1x128xf32>
    %130 = vector.broadcast %129 : vector<1x128xf32> to vector<16x128xf32>
    %131 = arith.select %122, %130, %128 : vector<16x128xi1>, vector<16x128xf32>
    %132 = vector.shape_cast %131 : vector<16x128xf32> to vector<16x1x128xf32>
    %133 = vector.shape_cast %103 : vector<16x128xf32> to vector<1x16x128xf32>
    %134 = vector.broadcast %132 : vector<16x1x128xf32> to vector<16x16x128xf32>
    %135 = vector.broadcast %133 : vector<1x16x128xf32> to vector<16x16x128xf32>
    %136 = arith.mulf %134, %135 : vector<16x16x128xf32>
    %137 = vector.shape_cast %136 : vector<16x16x128xf32> to vector<256x128xf32>
    %c0_38 = arith.constant 0 : index
    %c0_39 = arith.constant 0 : index
    %c0_40 = arith.constant 0 : index
    %138 = vector.load %arg4[%c0_38, %c0_39, %c0_40] : memref<1x4x256xf32, #tpu.memory_space<vmem>>, vector<1x4x256xf32>
    %139 = vector.shape_cast %138 : vector<1x4x256xf32> to vector<4x256xf32>
    %cst_41 = arith.constant dense<0.000000e+00> : vector<4x128xf32>
    %140 = tpu.matmul %139, %137, %cst_41 {dimension_numbers = #tpu.dot_dimension_numbers<[1], [0], [0], [1], [0, 0, 1, 1], [], []>} : vector<4x256xf32>, vector<256x128xf32>, vector<4x128xf32> -> vector<4x128xf32>
    %c0_42 = arith.constant 0 : index
    %c0_43 = arith.constant 0 : index
    %c0_44 = arith.constant 0 : index
    %141 = vector.load %arg5[%c0_42, %c0_43, %c0_44] : memref<1x4x128xf32, #tpu.memory_space<vmem>>, vector<1x4x128xf32>
    %142 = vector.shape_cast %141 : vector<1x4x128xf32> to vector<4x128xf32>
    %143 = vector.shape_cast %140 : vector<4x128xf32> to vector<1x4x128xf32>
    tpu.vector_store %arg5[%c0_42, %c0_43, %c0_44], %143 {strides = array<i32>} : memref<1x4x128xf32, #tpu.memory_space<vmem>>, vector<1x4x128xf32>,
    return
  }
  func.func @transform_0(%arg0: i32, %arg1: i32) -> i32 {
    %c0_i32 = arith.constant 0 : i32
    %c0_i32_0 = arith.constant 0 : i32
    return %c0_i32 : i32
  }
  func.func @transform_1(%arg0: i32, %arg1: i32) -> (i32, i32) {
    %c0_i32 = arith.constant 0 : i32
    %c0_i32_0 = arith.constant 0 : i32
    return %c0_i32, %arg1 : i32, i32
  }
  func.func @transform_2(%arg0: i32, %arg1: i32) -> (i32, i32, i32) {
    %c0_i32 = arith.constant 0 : i32
    %c0_i32_0 = arith.constant 0 : i32
    %c0_i32_1 = arith.constant 0 : i32
    return %arg0, %c0_i32, %c0_i32_0 : i32, i32, i32
  }
  func.func @transform_3(%arg0: i32, %arg1: i32) -> (i32, i32, i32) {
    %c0_i32 = arith.constant 0 : i32
    %c0_i32_0 = arith.constant 0 : i32
    return %arg0, %c0_i32, %arg1 : i32, i32, i32
  }
}

</mosaic_0001>

<llo_original>
// kernel: tpu_custom_call.1
$region0: #{tpu_custom_call.1}
  #allocation0 [shape = 'u32[]', space=smem, size = 0x4, offset = 0x4, fixed_abs, tag = 'smem constant byte address 0x4 - core index']
  #allocation1 [shape = 'u32[144,128]{1,0:T(1,128)}', space=vmem, size = 0x12000, scoped, tag = 'internal scratch']
  %s0 = inlined_call_operand.hbm [shape: f32[8], index: 0, kind: input, shape index: {}]
  %s1 = inlined_call_operand.vmem [shape: f32[2,128], index: 1, kind: input, shape index: {}]
  %s2 = inlined_call_operand.hbm [shape: f32[2,4,256], index: 2, kind: input, shape index: {}]
  %s3 = inlined_call_operand.hbm [shape: f32[2,4,128], index: 3, kind: output, shape index: {}]
  %s4 = sld [smem:[#allocation0]]
  $region53: #{tpu_custom_call.1} parent=0
    _
  %s6 = ssub.s32 1, %s4
  %s7 = scalar_select 0, %s6, %s4
  $region1: #{tpu_custom_call.1} parent=0
    #allocation2 [shape = 'u8[512]{0}', space=smem, size = 0x200, scoped, tag = 'input window, operand 0, single buffered']
    #allocation3 [shape = 's32[2]{0}', space=sflag, size = 0x8, scoped, tag = 'scoped memory for tpu_custom_call.1']
    #allocation4 [shape = 's32[2]{0}', space=sflag, size = 0x8, scoped, tag = 'scoped memory for tpu_custom_call.1']
    #allocation5 [shape = 's32[2]{0}', space=sflag, size = 0x8, scoped, tag = 'scoped memory for tpu_custom_call.1']
    #allocation6 [shape = 'u8[8192]{0}', space=vmem, size = 0x2000, scoped, tag = 'input window, operand 2']
    #allocation7 [shape = 'u8[4096]{0}', space=vmem, size = 0x1000, scoped, tag = 'output window, operand 0']
    %8 = vsyncpa [#allocation5], 0
    %9 = vsyncpa [#allocation3], 0
    %s10 = scalar_lea.sflag [#allocation3], 1
    %11 = vsyncpa %s10, 0
    %12 = vsyncpa [#allocation4], 0
    %s13 = scalar_lea.sflag [#allocation4], 1
    %14 = vsyncpa %s13, 0
    loop: start=0, step=1, limit=4
    $region2: #{tpu_custom_call.1} parent=1 // loop_pre_header
      _
    $region3: #{tpu_custom_call.1} parent=1 // loop_header
      %s16 = sphi 0, %s20
      %p17 = scmp.ge.s32.totalorder %s16, 4
      %s23 = sphi 0, %s35
      %s24 = sphi 0, %s31
      %s25 = sphi 0, %s23
      %s26 = sphi 0, %s24
      %s27 = sphi 0, %s25
      %s28 = sphi 0, %s26
      %s36 = sphi 0, %s36
      %s38 = sphi 0, %s36
      %s39 = sphi 0, %s38
      %s53 = sphi 0, %s39
      %s59 = sphi 0, %s61
      %s62 = sphi 0, %s59
      %s63 = sphi 0, %s62
      %s79 = sphi 0, %s63
      %s85 = sphi 0, %s87
      %s88 = sphi 0, %s85
      %s89 = sphi 0, %s88
      %s105 = sphi 0, %s89
      %s113 = sphi 0, %s115
      %s116 = sphi 0, %s113
      %s117 = sphi 0, %s116
      %s133 = sphi 0, %s117
    $region4: #{tpu_custom_call.1} parent=1 // loop_header_branch
      %19 = sbr.rel (%p17) target = $region8
    $region5: #{tpu_custom_call.1} parent=1 // loop_body
      %s21 = ssub.s32 %s16, 1
      %s22 = ssub.s32 %s16, 2
      %s29 = sadd.s32 1, %s24
      %p30 = scmp.ge.s32.totalorder %s29, 1
      %s31 = scalar_select %p30, 0, %s29
      %s32 = sadd.s32 1, %s23
      %s33 = scalar_select %p30, %s32, %s23
      %p34 = scmp.ge.s32.totalorder %s33, 2
      %s35 = scalar_select %p34, 0, %s33
      %s37 = sadd.s32 %s36, 1
      %p40 = scmp.eq.s32.totalorder %s16, 1
      %p41 = scmp.ne.s32.totalorder %s36, %s38
      %p42 = scmp.eq.s32.totalorder %s16, 0
      %p43 = por %p41, %p42
      %p44 = scmp.ne.s32.totalorder %s36, %s38
      %p45 = scmp.eq.s32.totalorder %s21, 1
      %p46 = por %p44, %p45
      %p47 = scmp.ne.s32.totalorder %s38, %s39
      %p48 = scmp.eq.s32.totalorder %s21, 0
      %p49 = por %p47, %p48
      %p50 = scmp.ne.s32.totalorder %s38, %s39
      %p51 = scmp.eq.s32.totalorder %s22, 1
      %p52 = por %p50, %p51
      %p54 = scmp.ne.s32.totalorder %s39, %s53
      %p55 = scmp.eq.s32.totalorder %s22, 0
      %p56 = por %p54, %p55
      %s57 = ssub.s32 %s24, %s31
      %p58 = scmp.eq.s32.totalorder %s57, 0
      %s60 = sadd.s32 %s59, 1
      %s61 = scalar_select %p58, %s59, %s60
      %p64 = pneg %p58
      %p65 = scmp.eq.s32.totalorder %s16, 1
      %p66 = por %p64, %p65
      %p67 = scmp.ne.s32.totalorder %s59, %s62
      %p68 = scmp.eq.s32.totalorder %s16, 0
      %p69 = por %p67, %p68
      %p70 = scmp.ne.s32.totalorder %s59, %s62
      %p71 = scmp.eq.s32.totalorder %s21, 1
      %p72 = por %p70, %p71
      %p73 = scmp.ne.s32.totalorder %s62, %s63
      %p74 = scmp.eq.s32.totalorder %s21, 0
      %p75 = por %p73, %p74
      %p76 = scmp.ne.s32.totalorder %s62, %s63
      %p77 = scmp.eq.s32.totalorder %s22, 1
      %p78 = por %p76, %p77
      %p80 = scmp.ne.s32.totalorder %s63, %s79
      %p81 = scmp.eq.s32.totalorder %s22, 0
      %p82 = por %p80, %p81
      %s83 = ssub.s32 %s23, %s35
      %p84 = scmp.eq.s32.totalorder %s83, 0
      %s86 = sadd.s32 %s85, 1
      %s87 = scalar_select %p84, %s85, %s86
      %p90 = pneg %p84
      %p91 = scmp.eq.s32.totalorder %s16, 1
      %p92 = por %p90, %p91
      %p93 = scmp.ne.s32.totalorder %s85, %s88
      %p94 = scmp.eq.s32.totalorder %s16, 0
      %p95 = por %p93, %p94
      %p96 = scmp.ne.s32.totalorder %s85, %s88
      %p97 = scmp.eq.s32.totalorder %s21, 1
      %p98 = por %p96, %p97
      %p99 = scmp.ne.s32.totalorder %s88, %s89
      %p100 = scmp.eq.s32.totalorder %s21, 0
      %p101 = por %p99, %p100
      %p102 = scmp.ne.s32.totalorder %s88, %s89
      %p103 = scmp.eq.s32.totalorder %s22, 1
      %p104 = por %p102, %p103
      %p106 = scmp.ne.s32.totalorder %s89, %s105
      %p107 = scmp.eq.s32.totalorder %s22, 0
      %p108 = por %p106, %p107
      %s109 = ssub.s32 %s23, %s35
      %s110 = ssub.s32 %s24, %s31
      %s111 = sor.u32 %s109, %s110
      %p112 = scmp.eq.s32.totalorder %s111, 0
      %s114 = sadd.s32 %s113, 1
      %s115 = scalar_select %p112, %s113, %s114
      %p118 = pneg %p112
      %p119 = scmp.eq.s32.totalorder %s16, 1
      %p120 = por %p118, %p119
      %p121 = scmp.ne.s32.totalorder %s113, %s116
      %p122 = scmp.eq.s32.totalorder %s16, 0
      %p123 = por %p121, %p122
      %p124 = scmp.ne.s32.totalorder %s113, %s116
      %p125 = scmp.eq.s32.totalorder %s21, 1
      %p126 = por %p124, %p125
      %p127 = scmp.ne.s32.totalorder %s116, %s117
      %p128 = scmp.eq.s32.totalorder %s21, 0
      %p129 = por %p127, %p128
      %p130 = scmp.ne.s32.totalorder %s116, %s117
      %p131 = scmp.eq.s32.totalorder %s22, 1
      %p132 = por %p130, %p131
      %p134 = scmp.ne.s32.totalorder %s117, %s133
      %p135 = scmp.eq.s32.totalorder %s22, 0
      %p136 = por %p134, %p135
      %p137 = scmp.le.s32.totalorder 1, %s16
      %p138 = scmp.lt.s32.totalorder %s16, 3
      %p139 = pnand %p137, %p138
      %p140 = pneg %p139
      // Predicated region
      $region9: #{tpu_custom_call.1} parent=5 // pred_check
        _
      $region10: #{tpu_custom_call.1} parent=5 // pred_check_branch
        %142 = sbr.rel (%p139) target = $region12
      $region11: #{tpu_custom_call.1} parent=5 // pred_region
        %s143 = ssub.s32 %s16, 1
        // Predicated region
        $region13: #{tpu_custom_call.1} parent=11 // pred_check
          %p144 = pneg %p49
        $region14: #{tpu_custom_call.1} parent=11 // pred_check_branch
          %146 = sbr.rel (%p144) target = $region16
        $region15: #{tpu_custom_call.1} parent=11 // pred_region
          %s148 = ssub.s32 16, 16
          %149 = vsyncadd [#allocation5], %s148
          %152 = dma.hbm_to_smem %s0, 16, [#allocation2], [#allocation5]
        $region16: #{tpu_custom_call.1} parent=11 // pred_fallthru
          _
        // Predicated region
        $region17: #{tpu_custom_call.1} parent=11 // pred_check
          %p153 = pneg %p75
        $region18: #{tpu_custom_call.1} parent=11 // pred_check_branch
          %155 = sbr.rel (%p153) target = $region20
        $region19: #{tpu_custom_call.1} parent=11 // pred_region
          %p156 = scmp.lt.s32.totalorder %s26, 0
          %s157 = scalar_select %p156, %s26, 0
          %s158 = smul.addr %s157, 2
          %s159 = scalar_lea.vmem %s1, %s158
        $region20: #{tpu_custom_call.1} parent=11 // pred_fallthru
          _
      $region12: #{tpu_custom_call.1} parent=5 // pred_fallthru
        _
      %p160 = scmp.lt.s32.totalorder %s16, 2
      // Predicated region
      $region21: #{tpu_custom_call.1} parent=5 // pred_check
        %p161 = pneg %p160
      $region22: #{tpu_custom_call.1} parent=5 // pred_check_branch
        %163 = sbr.rel (%p161) target = $region24
      $region23: #{tpu_custom_call.1} parent=5 // pred_region
        // Predicated region
        $region25: #{tpu_custom_call.1} parent=23 // pred_check
          %p164 = pneg %p95
        $region26: #{tpu_custom_call.1} parent=23 // pred_check_branch
          %166 = sbr.rel (%p164) target = $region28
        $region27: #{tpu_custom_call.1} parent=23 // pred_region
          %s167 = sand.u32 %s85, 1
          %s168 = scalar_lea.sflag [#allocation3], %s167
          %s169 = sand.u32 %s85, 1
          %s170 = smul.addr %s169, 8
          %s171 = scalar_lea.vmem [#allocation6], %s170
          %s173 = ssub.s32 128, 128
          %174 = vsyncadd %s168, %s173
          %s175 = smul.addr %s23, 2
          %s176 = smul.addr %s175, 64
          %s177 = scalar_lea.hbm %s2, %s176
          %s179 = sshll.u32 %s171, 4
          %s180 = int_to_ptr.vmem [resolvable:$true] %s179
          %182 = dma.hbm_to_vmem [thread:$0]  %s177, 128, %s180, %s168
        $region28: #{tpu_custom_call.1} parent=23 // pred_fallthru
          _
      $region24: #{tpu_custom_call.1} parent=5 // pred_fallthru
        _
      %p183 = scmp.le.s32.totalorder 1, %s16
      %p184 = scmp.lt.s32.totalorder %s16, 3
      %p185 = pnand %p183, %p184
      %p186 = pneg %p185
      // Predicated region
      $region29: #{tpu_custom_call.1} parent=5 // pred_check
        _
      $region30: #{tpu_custom_call.1} parent=5 // pred_check_branch
        %188 = sbr.rel (%p185) target = $region32
      $region31: #{tpu_custom_call.1} parent=5 // pred_region
        %s189 = ssub.s32 %s16, 1
        // Predicated region
        $region33: #{tpu_custom_call.1} parent=31 // pred_check
          %p190 = pneg %p49
        $region34: #{tpu_custom_call.1} parent=31 // pred_check_branch
          %192 = sbr.rel (%p190) target = $region36
        $region35: #{tpu_custom_call.1} parent=31 // pred_region
          %193 = dma.done [#allocation5], 16
        $region36: #{tpu_custom_call.1} parent=31 // pred_fallthru
          _
        %s194 = sand.u32 %s88, 1
        %s195 = scalar_lea.sflag [#allocation3], %s194
        %s196 = sand.u32 %s88, 1
        %s197 = smul.addr %s196, 8
        %s198 = scalar_lea.vmem [#allocation6], %s197
        // Predicated region
        $region37: #{tpu_custom_call.1} parent=31 // pred_check
          %p199 = pneg %p101
        $region38: #{tpu_custom_call.1} parent=31 // pred_check_branch
          %201 = sbr.rel (%p199) target = $region40
        $region39: #{tpu_custom_call.1} parent=31 // pred_region
          %202 = dma.done %s195, 128
        $region40: #{tpu_custom_call.1} parent=31 // pred_fallthru
          _
        %203 = sfence
        %p204 = pneg %p49
        %p205 = pneg %p46
        %p206 = scmp.lt.s32.totalorder %s26, 0
        %s207 = scalar_select %p206, %s26, 0
        %s208 = smul.addr %s207, 2
        %s209 = scalar_lea.vmem %s1, %s208
        %p210 = pneg %p75
        %p211 = pneg %p72
        %s212 = sand.u32 %s88, 1
        %s213 = scalar_lea.sflag [#allocation3], %s212
        %s214 = sand.u32 %s88, 1
        %s215 = smul.addr %s214, 8
        %s216 = scalar_lea.vmem [#allocation6], %s215
        %p217 = pneg %p101
        %p218 = pneg %p98
        %p219 = pneg %p129
        %p220 = pneg %p126
        %s221 = sand.u32 %s116, 1
        %s222 = scalar_lea.sflag [#allocation4], %s221
        %s223 = sand.u32 %s116, 1
        %s224 = smul.addr %s223, 4
        %s225 = scalar_lea.vmem [#allocation7], %s224
        %p226 = scmp.lt.s32.totalorder %s26, 0
        %s227 = scalar_select %p226, %s26, 0
        %s228 = smul.addr %s227, 2
        %s229 = scalar_lea.vmem %s1, %s228
        %s230 = smul.u32 %s25, 4
        %s231 = sld [smem:[#allocation2 + %s230]]
        %s232 = sadd.s32 %s230, 1
        %s233 = sld [smem:[#allocation2 + %s232]]
        %s234 = sadd.s32 %s230, 2
        %s235 = sld [smem:[#allocation2 + %s234]]
        %s236 = sadd.s32 %s230, 3
        %s237 = sld [smem:[#allocation2 + %s236]]
        %v238 = vld [vmem:[%s229] sm:$0x3]
        %v239 = vstv %s231
        %v240 = vmul.f32 %v239, %v238
        %v241 = vstv %s233
        %v242 = vmul.f32 %v241, %v238
        %v244 = vrot.slane %v242, 1
        %v246 = vadd.f32 %v240, %v244
        %v247 = vstv %s235
        %v248 = vmul.f32 %v247, %v238
        %v249 = vstv %s237
        %v250 = vmul.f32 %v249, %v238
        %v252 = vrot.slane %v250, 1
        %v254 = vadd.f32 %v248, %v252
        %v255 = vrcp.pop %v254
        %v256 = vmul.f32 1.0, %v255
        %v257 = vmul.f32 %v246, %v256
        %v258 = vmul.f32 %v257, 0.125
        %v259 = vsub.f32 %v258, 1.0
        %v260 = vmax.f32 %v259, -1.1
        %v261 = vmin.f32 %v260, 1.1
        %v262 = vsub.f32 %v254, 1.0
        %v263 = vmul.f32 %v262, 0.25
        %v264 = vsub.f32 %v263, 1.0
        %v265 = vmax.f32 %v264, -1.1
        %v266 = vmin.f32 %v265, 1.1
        %v267 = vadd.f32 %v261, 1.0
        %v268 = vmul.f32 %v267, 16.0
        %v269 = vsub.f32 %v268, 1.0
        %v270 = vmul.f32 %v269, 0.5
        %v271 = vadd.f32 %v266, 1.0
        %v272 = vmul.f32 %v271, 16.0
        %v273 = vsub.f32 %v272, 1.0
        %v274 = vmul.f32 %v273, 0.5
        %v275 = vfloor.f32 %v270
        %v276 = vfloor.f32 %v274
        %v277 = vsub.f32 %v270, %v275
        %v278 = vsub.f32 %v274, %v276
        %v279 = vcvt.f32.s32.to.zero.pseudo %v275
        %v280 = vcvt.f32.s32.to.zero.pseudo %v276
        %v281 = vadd.s32 %v279, 1
        %v282 = vadd.s32 %v280, 1
        %v283 = vsub.f32 1.0, %v277
        %vm284 = vcmp.ge.s32.totalorder %v279, 0
        %vm285 = vcmp.lt.s32.totalorder %v279, 16
        %vm286 = vmand %vm284, %vm285
        %v287 = vsel %vm286, %v283, 0.0
        %vm288 = vcmp.ge.s32.totalorder %v281, 0
        %vm289 = vcmp.lt.s32.totalorder %v281, 16
        %vm290 = vmand %vm288, %vm289
        %v291 = vsel %vm290, %v277, 0.0
        %v292 = vlaneseq
        %v293 = vshrl.u32 %v292, 7
        %v294 = vadd.s32 %v293, 8
        %v295 = vlaneseq
        %v296 = vshrl.u32 %v295, 7
        %v297 = vsub.s32 0, %v296
        %v298 = vrot.slane %v279, %v297
        %vm299 = vcmp.eq.s32.totalorder %v293, %v298
        %vm300 = vcmp.eq.s32.totalorder %v294, %v298
        %v301 = vlaneseq
        %v302 = vshrl.u32 %v301, 7
        %v303 = vsub.s32 0, %v302
        %v304 = vrot.slane %v281, %v303
        %vm305 = vcmp.eq.s32.totalorder %v293, %v304
        %vm306 = vcmp.eq.s32.totalorder %v294, %v304
        %v307 = vlaneseq
        %v308 = vshrl.u32 %v307, 7
        %v309 = vsub.s32 0, %v308
        %v310 = vrot.slane %v291, %v309
        %v311 = vsel %vm305, %v310, 0.0
        %v312 = vsel %vm306, %v310, 0.0
        %v313 = vlaneseq
        %v314 = vshrl.u32 %v313, 7
        %v315 = vsub.s32 0, %v314
        %v316 = vrot.slane %v287, %v315
        %v317 = vsel %vm299, %v316, %v311
        %v318 = vsel %vm300, %v316, %v312
        %v319 = vsub.f32 1.0, %v278
        %vm320 = vcmp.ge.s32.totalorder %v280, 0
        %vm321 = vcmp.lt.s32.totalorder %v280, 16
        %vm322 = vmand %vm320, %vm321
        %v323 = vsel %vm322, %v319, 0.0
        %vm324 = vcmp.ge.s32.totalorder %v282, 0
        %vm325 = vcmp.lt.s32.totalorder %v282, 16
        %vm326 = vmand %vm324, %vm325
        %v327 = vsel %vm326, %v278, 0.0
        %v328 = vlaneseq
        %v329 = vshrl.u32 %v328, 7
        %v330 = vsub.s32 0, %v329
        %v331 = vrot.slane %v280, %v330
        %vm332 = vcmp.eq.s32.totalorder %v293, %v331
        %vm333 = vcmp.eq.s32.totalorder %v294, %v331
        %v334 = vlaneseq
        %v335 = vshrl.u32 %v334, 7
        %v336 = vsub.s32 0, %v335
        %v337 = vrot.slane %v282, %v336
        %vm338 = vcmp.eq.s32.totalorder %v293, %v337
        %vm339 = vcmp.eq.s32.totalorder %v294, %v337
        %v340 = vlaneseq
        %v341 = vshrl.u32 %v340, 7
        %v342 = vsub.s32 0, %v341
        %v343 = vrot.slane %v327, %v342
        %v344 = vsel %vm338, %v343, 0.0
        %v345 = vsel %vm339, %v343, 0.0
        %v346 = vlaneseq
        %v347 = vshrl.u32 %v346, 7
        %v348 = vsub.s32 0, %v347
        %v349 = vrot.slane %v323, %v348
        %v350 = vsel %vm332, %v349, %v344
        %v351 = vsel %vm333, %v349, %v345
        %v354 = vcombine.high %v350, %v350
        %v356 = vunpack.c.l.s4 1966171168
        %v357 = vunpack.c.0.s8 %v356
        %v358 = vlaneseq
        %v359 = vshrl.u32 %v358, 7
        %v360 = vsub.s32 %v357, %v359
        %v361 = vrot.slane %v350, %v360
        %v363 = vunpack.c.l.s4 1966171168
        %v364 = vunpack.c.0.s8 %v363
        %v365 = vlaneseq
        %v366 = vshrl.u32 %v365, 7
        %v367 = vsub.s32 %v364, %v366
        %v368 = vrot.slane %v354, %v367
        %v369 = vcombine.high %v361, %v361
        %v370 = vcombine.high %v368, %v368
        %v372 = vunpack.c.l.s4 1966171168
        %v373 = vunpack.c.0.s8 %v372
        %v374 = vlaneseq
        %v375 = vshrl.u32 %v374, 7
        %v376 = vsub.s32 %v373, %v375
        %v377 = vrot.slane %v361, %v376
        %v379 = vunpack.c.l.s4 1966171168
        %v380 = vunpack.c.0.s8 %v379
        %v381 = vlaneseq
        %v382 = vshrl.u32 %v381, 7
        %v383 = vsub.s32 %v380, %v382
        %v384 = vrot.slane %v368, %v383
        %v386 = vunpack.c.l.s4 1966171168
        %v387 = vunpack.c.0.s8 %v386
        %v388 = vlaneseq
        %v389 = vshrl.u32 %v388, 7
        %v390 = vsub.s32 %v387, %v389
        %v391 = vrot.slane %v369, %v390
        %v393 = vunpack.c.l.s4 1966171168
        %v394 = vunpack.c.0.s8 %v393
        %v395 = vlaneseq
        %v396 = vshrl.u32 %v395, 7
        %v397 = vsub.s32 %v394, %v396
        %v398 = vrot.slane %v370, %v397
        %v399 = vcombine.high %v377, %v377
        %v400 = vcombine.high %v384, %v384
        %v401 = vcombine.high %v391, %v391
        %v402 = vcombine.high %v398, %v398
        %v403 = vcombine.high %v351, %v351
        %v405 = vunpack.c.l.s4 1966171168
        %v406 = vunpack.c.0.s8 %v405
        %v407 = vlaneseq
        %v408 = vshrl.u32 %v407, 7
        %v409 = vsub.s32 %v406, %v408
        %v410 = vrot.slane %v351, %v409
        %v412 = vunpack.c.l.s4 1966171168
        %v413 = vunpack.c.0.s8 %v412
        %v414 = vlaneseq
        %v415 = vshrl.u32 %v414, 7
        %v416 = vsub.s32 %v413, %v415
        %v417 = vrot.slane %v403, %v416
        %v418 = vcombine.high %v410, %v410
        %v419 = vcombine.high %v417, %v417
        %v421 = vunpack.c.l.s4 1966171168
        %v422 = vunpack.c.0.s8 %v421
        %v423 = vlaneseq
        %v424 = vshrl.u32 %v423, 7
        %v425 = vsub.s32 %v422, %v424
        %v426 = vrot.slane %v410, %v425
        %v428 = vunpack.c.l.s4 1966171168
        %v429 = vunpack.c.0.s8 %v428
        %v430 = vlaneseq
        %v431 = vshrl.u32 %v430, 7
        %v432 = vsub.s32 %v429, %v431
        %v433 = vrot.slane %v417, %v432
        %v435 = vunpack.c.l.s4 1966171168
        %v436 = vunpack.c.0.s8 %v435
        %v437 = vlaneseq
        %v438 = vshrl.u32 %v437, 7
        %v439 = vsub.s32 %v436, %v438
        %v440 = vrot.slane %v418, %v439
        %v442 = vunpack.c.l.s4 1966171168
        %v443 = vunpack.c.0.s8 %v442
        %v444 = vlaneseq
        %v445 = vshrl.u32 %v444, 7
        %v446 = vsub.s32 %v443, %v445
        %v447 = vrot.slane %v419, %v446
        %v448 = vcombine.high %v426, %v426
        %v449 = vcombine.high %v433, %v433
        %v450 = vcombine.high %v440, %v440
        %v451 = vcombine.high %v447, %v447
        %v452 = vlaneseq
        %v453 = vshrl.u32 %v452, 7
        %v454 = vsub.s32 0, %v453
        %v455 = vrot.slane %v377, %v454
        %v456 = vlaneseq
        %v457 = vshrl.u32 %v456, 7
        %v458 = vsub.s32 0, %v457
        %v459 = vrot.slane %v391, %v458
        %v460 = vlaneseq
        %v461 = vshrl.u32 %v460, 7
        %v462 = vsub.s32 0, %v461
        %v463 = vrot.slane %v399, %v462
        %v464 = vlaneseq
        %v465 = vshrl.u32 %v464, 7
        %v466 = vsub.s32 0, %v465
        %v467 = vrot.slane %v401, %v466
        %v468 = vlaneseq
        %v469 = vshrl.u32 %v468, 7
        %v470 = vsub.s32 0, %v469
        %v471 = vrot.slane %v384, %v470
        %v472 = vlaneseq
        %v473 = vshrl.u32 %v472, 7
        %v474 = vsub.s32 0, %v473
        %v475 = vrot.slane %v398, %v474
        %v476 = vlaneseq
        %v477 = vshrl.u32 %v476, 7
        %v478 = vsub.s32 0, %v477
        %v479 = vrot.slane %v400, %v478
        %v480 = vlaneseq
        %v481 = vshrl.u32 %v480, 7
        %v482 = vsub.s32 0, %v481
        %v483 = vrot.slane %v402, %v482
        %v484 = vlaneseq
        %v485 = vshrl.u32 %v484, 7
        %v486 = vsub.s32 0, %v485
        %v487 = vrot.slane %v426, %v486
        %v488 = vlaneseq
        %v489 = vshrl.u32 %v488, 7
        %v490 = vsub.s32 0, %v489
        %v491 = vrot.slane %v440, %v490
        %v492 = vlaneseq
        %v493 = vshrl.u32 %v492, 7
        %v494 = vsub.s32 0, %v493
        %v495 = vrot.slane %v448, %v494
        %v496 = vlaneseq
        %v497 = vshrl.u32 %v496, 7
        %v498 = vsub.s32 0, %v497
        %v499 = vrot.slane %v450, %v498
        %v500 = vlaneseq
        %v501 = vshrl.u32 %v500, 7
        %v502 = vsub.s32 0, %v501
        %v503 = vrot.slane %v433, %v502
        %v504 = vlaneseq
        %v505 = vshrl.u32 %v504, 7
        %v506 = vsub.s32 0, %v505
        %v507 = vrot.slane %v447, %v506
        %v508 = vlaneseq
        %v509 = vshrl.u32 %v508, 7
        %v510 = vsub.s32 0, %v509
        %v511 = vrot.slane %v449, %v510
        %v512 = vlaneseq
        %v513 = vshrl.u32 %v512, 7
        %v514 = vsub.s32 0, %v513
        %v515 = vrot.slane %v451, %v514
        %v532 = vmul.f32 %v455, %v317
        %v533 = vmul.f32 %v455, %v318
        %v534 = vmul.f32 %v459, %v317
        %v535 = vmul.f32 %v459, %v318
        %v536 = vmul.f32 %v463, %v317
        %v537 = vmul.f32 %v463, %v318
        %v538 = vmul.f32 %v467, %v317
        %v539 = vmul.f32 %v467, %v318
        %v540 = vmul.f32 %v471, %v317
        %v541 = vmul.f32 %v471, %v318
        %v542 = vmul.f32 %v475, %v317
        %v543 = vmul.f32 %v475, %v318
        %v544 = vmul.f32 %v479, %v317
        %v545 = vmul.f32 %v479, %v318
        %v546 = vmul.f32 %v483, %v317
        %v547 = vmul.f32 %v483, %v318
        %v548 = vmul.f32 %v487, %v317
        %v549 = vmul.f32 %v487, %v318
        %v550 = vmul.f32 %v491, %v317
        %v551 = vmul.f32 %v491, %v318
        %v552 = vmul.f32 %v495, %v317
        %v553 = vmul.f32 %v495, %v318
        %v554 = vmul.f32 %v499, %v317
        %v555 = vmul.f32 %v499, %v318
        %v556 = vmul.f32 %v503, %v317
        %v557 = vmul.f32 %v503, %v318
        %v558 = vmul.f32 %v507, %v317
        %v559 = vmul.f32 %v507, %v318
        %v560 = vmul.f32 %v511, %v317
        %v561 = vmul.f32 %v511, %v318
        %v562 = vmul.f32 %v515, %v317
        %v563 = vmul.f32 %v515, %v318
        %v564 = vld [vmem:[%s198] sm:$0xff]
        %v566 = vcombine.high %v564, %v564
        %568 = vmatprep.subr.mxu0 0.0
        %569 = vmatpush1.msra.mxu0 %v532
        %570 = vmatprep.subr.mxu0 0.0
        %571 = vmatpush1.msra.mxu0 %v533
        %572 = vmatprep.subr.mxu0 0.0
        %573 = vmatpush1.msra.mxu0 %v534
        %574 = vmatprep.subr.mxu0 0.0
        %575 = vmatpush1.msra.mxu0 %v535
        %576 = vmatprep.subr.mxu0 0.0
        %577 = vmatpush1.msra.mxu0 %v536
        %578 = vmatprep.subr.mxu0 0.0
        %579 = vmatpush1.msra.mxu0 %v537
        %580 = vmatprep.subr.mxu0 0.0
        %581 = vmatpush1.msra.mxu0 %v538
        %582 = vmatprep.subr.mxu0 0.0
        %583 = vmatpush1.msra.mxu0 %v539
        %584 = vmatprep.subr.mxu0 0.0
        %585 = vmatpush1.msra.mxu0 %v540
        %586 = vmatprep.subr.mxu0 0.0
        %587 = vmatpush1.msra.mxu0 %v541
        %588 = vmatprep.subr.mxu0 0.0
        %589 = vmatpush1.msra.mxu0 %v542
        %590 = vmatprep.subr.mxu0 0.0
        %591 = vmatpush1.msra.mxu0 %v543
        %592 = vmatprep.subr.mxu0 0.0
        %593 = vmatpush1.msra.mxu0 %v544
        %594 = vmatprep.subr.mxu0 0.0
        %595 = vmatpush1.msra.mxu0 %v545
        %596 = vmatprep.subr.mxu0 0.0
        %597 = vmatpush1.msra.mxu0 %v546
        %598 = vmatprep.subr.mxu0 0.0
        %599 = vmatpush1.msra.mxu0 %v547
        %600 = vmatprep.subr.mxu0 0.0
        %601 = vmatpush1.msra.mxu0 %v548
        %602 = vmatprep.subr.mxu0 0.0
        %603 = vmatpush1.msra.mxu0 %v549
        %604 = vmatprep.subr.mxu0 0.0
        %605 = vmatpush1.msra.mxu0 %v550
        %606 = vmatprep.subr.mxu0 0.0
        %607 = vmatpush1.msra.mxu0 %v551
        %608 = vmatprep.subr.mxu0 0.0
        %609 = vmatpush1.msra.mxu0 %v552
        %610 = vmatprep.subr.mxu0 0.0
        %611 = vmatpush1.msra.mxu0 %v553
        %612 = vmatprep.subr.mxu0 0.0
        %613 = vmatpush1.msra.mxu0 %v554
        %614 = vmatprep.subr.mxu0 0.0
        %615 = vmatpush1.msra.mxu0 %v555
        %616 = vmatprep.subr.mxu0 0.0
        %617 = vmatpush1.msra.mxu0 %v556
        %618 = vmatprep.subr.mxu0 0.0
        %619 = vmatpush1.msra.mxu0 %v557
        %620 = vmatprep.subr.mxu0 0.0
        %621 = vmatpush1.msra.mxu0 %v558
        %622 = vmatprep.subr.mxu0 0.0
        %623 = vmatpush1.msra.mxu0 %v559
        %624 = vmatprep.subr.mxu0 0.0
        %625 = vmatpush1.msra.mxu0 %v560
        %626 = vmatprep.subr.mxu0 0.0
        %627 = vmatpush1.msra.mxu0 %v561
        %628 = vmatprep.subr.mxu0 0.0
        %629 = vmatpush1.msra.mxu0 %v562
        %630 = vmatprep.subr.mxu0 0.0
        %631 = vmatpush1.msra.mxu0 %v563
        %632 = vmatprep.mubr.f32.mxu0 %v566
        %633 = vmatmul.mubr.f32.gmra.mrb[0].mxu0 %v564
        %v634 = vpop.f32.mrb[0].mxu0
        %v635 = vadd.f32 0.0, %v634
        %v636 = vpop.f32.mrb[0].mxu0
        %637 = vdwg.mxu0
        %638 = vst [vmem:[%s225] sm:$0xf] %v635
        %s639 = sand.u32 %s116, 1
        %s640 = scalar_lea.sflag [#allocation4], %s639
        %s641 = sand.u32 %s116, 1
        %s642 = smul.addr %s641, 4
        %s643 = scalar_lea.vmem [#allocation7], %s642
        // Predicated region
        $region41: #{tpu_custom_call.1} parent=31 // pred_check
          %p644 = pneg %p126
        $region42: #{tpu_custom_call.1} parent=31 // pred_check_branch
          %646 = sbr.rel (%p644) target = $region44
        $region43: #{tpu_custom_call.1} parent=31 // pred_region
          %s648 = ssub.s32 64, 64
          %649 = vsyncadd %s640, %s648
          %s650 = sadd.s32 %s26, %s25
          %s651 = smul.addr %s650, 64
          %s652 = scalar_lea.hbm %s3, %s651
          %s654 = sshll.u32 %s643, 4
          %s655 = int_to_ptr.vmem [resolvable:$true] %s654
          %657 = dma.vmem_to_hbm [thread:$0]  %s655, 64, %s652, %s640
        $region44: #{tpu_custom_call.1} parent=31 // pred_fallthru
          _
      $region32: #{tpu_custom_call.1} parent=5 // pred_fallthru
        _
      %p658 = scmp.le.s32.totalorder 2, %s16
      // Predicated region
      $region45: #{tpu_custom_call.1} parent=5 // pred_check
        %p659 = pneg %p658
      $region46: #{tpu_custom_call.1} parent=5 // pred_check_branch
        %661 = sbr.rel (%p659) target = $region48
      $region47: #{tpu_custom_call.1} parent=5 // pred_region
        %s662 = ssub.s32 %s16, 2
        // Predicated region
        $region49: #{tpu_custom_call.1} parent=47 // pred_check
          %p663 = pneg %p132
        $region50: #{tpu_custom_call.1} parent=47 // pred_check_branch
          %665 = sbr.rel (%p663) target = $region52
        $region51: #{tpu_custom_call.1} parent=47 // pred_region
          %s666 = sand.u32 %s117, 1
          %s667 = scalar_lea.sflag [#allocation4], %s666
          %s668 = sand.u32 %s117, 1
          %s669 = smul.addr %s668, 4
          %s670 = scalar_lea.vmem [#allocation7], %s669
          %671 = dma.done %s667, 64
        $region52: #{tpu_custom_call.1} parent=47 // pred_fallthru
          _
      $region48: #{tpu_custom_call.1} parent=5 // pred_fallthru
        _
    $region6: #{tpu_custom_call.1} parent=1 // loop_footer
      %s20 = sadd.s32 1, %s16
    $region7: #{tpu_custom_call.1} parent=1 // loop_footer_branch
      %15 = sbr.rel target = $region3
    $region8: #{tpu_custom_call.1} parent=1 // loop_exit
      _
    %672 = vsyncpa [#allocation3], 1
    %s673 = scalar_lea.sflag [#allocation3], 1
    %674 = vsyncpa %s673, 1
    %675 = vsyncpa [#allocation4], 1
    %s676 = scalar_lea.sflag [#allocation4], 1
    %677 = vsyncpa %s676, 1
    %678 = vsyncpa [#allocation5], 1
    %s679 = scalar_lea.sflag [#allocation5], 1
    %680 = vsyncpa %s679, 1

</llo_original>
